<compile_context>
chip_gen: v5e
topology: v5e:2x2
jax: 0.10.0
libtpu: 0.0.40
codegen_flags: <defaults>
</compile_context>

<pallas_src>
import functools

import numpy as np
import jax
import jax.numpy as jnp
from jax.experimental import pallas as pl
from jax.experimental.pallas import tpu as pltpu


def _laplacian_loss_kernel(xk_ref, lt_ref, xn_ref, invdeg_ref, o_ref, acc_ref,
                           *, B, C):
    # xk_ref:     (Mp, TK)  f32        stacked-x LHS, K-slice
    # lt_ref:     (TK, TN)  bf16/f32   L^T tile (RHS)
    # xn_ref:     (Mp, TN)  f32        stacked-x N-slice (for the diff)
    # invdeg_ref: (1,  TN)  f32        1 / (deg + 1e-6)
    # o_ref:      (B,  TN)  f32        per-batch loss tile (resident across k)
    # acc_ref:    (Mp, TN)  f32        matmul accumulator scratch
    k = pl.program_id(1)

    @pl.when(k == 0)
    def _():
        acc_ref[...] = jnp.zeros_like(acc_ref)

    # MXU: batches/coords fused into M, vertices lane-dense along N.
    lt = lt_ref[...].astype(jnp.float32)
    acc_ref[...] += jnp.dot(xk_ref[...], lt,
                            preferred_element_type=jnp.float32)

    @pl.when(k == pl.num_programs(1) - 1)
    def _():
        y = acc_ref[...] * invdeg_ref[...]       # (Mp, TN) * (1, TN) broadcast
        d = y - xn_ref[...]
        d2 = d * d                               # rows ordered as (c*B + b)
        # Reduce over the C coordinate groups: contiguous B-row slabs.
        total = d2[0:B]
        for c in range(1, C):
            total = total + d2[c * B:(c + 1) * B]
        o_ref[...] = total * (1.0 / C)           # fold the mean's 1/C here


def preframe_laplacian_loss(laplacian, x, *, tile=256,
                            lap_dtype=jnp.bfloat16):
    """laplacian: (nv, nv), x: (B, nv, C) -> (B, nv) f32."""
    B, nv, C = x.shape
    assert tile % 128 == 0, "tile must be a multiple of 128 (lane width)"

    laplacian = laplacian.astype(jnp.float32)
    x = x.astype(jnp.float32)

    # Column-sum degree (matches torch laplacian.sum(0)); reciprocal hoisted
    # out of the kernel.
    inv_deg = 1.0 / (jnp.sum(laplacian, axis=0) + 1e-6)          # (nv,)

    # Pad vertices to a multiple of the tile so every block is lane-dense.
    nvp = ((nv + tile - 1) // tile) * tile
    pad_v = nvp - nv

    # Stack batches/coords into the matmul M dim; rows ordered (c*B + b) so the
    # per-batch coord reduction is a sum over contiguous B-row groups.
    M = C * B
    Mp = ((M + 7) // 8) * 8                                      # sublane pad
    xs = jnp.transpose(x, (2, 0, 1)).reshape(M, nv)              # (C*B, nv)
    xs = jnp.pad(xs, ((0, Mp - M), (0, pad_v)))
    lt = jnp.pad(laplacian.T, ((0, pad_v), (0, pad_v))).astype(lap_dtype)
    inv_deg = jnp.pad(inv_deg, ((0, pad_v),)).reshape(1, nvp)

    n_tiles = nvp // tile
    kernel = functools.partial(_laplacian_loss_kernel, B=B, C=C)

    out = pl.pallas_call(
        kernel,
        out_shape=jax.ShapeDtypeStruct((B, nvp), jnp.float32),
        grid_spec=pltpu.PrefetchScalarGridSpec(
            num_scalar_prefetch=0,
            grid=(n_tiles, n_tiles),                 # (output tiles, K tiles)
            in_specs=[
                pl.BlockSpec((Mp, tile), lambda n, k: (0, k)),    # xs K-slice
                pl.BlockSpec((tile, tile), lambda n, k: (k, n)),  # L^T tile
                pl.BlockSpec((Mp, tile), lambda n, k: (0, n)),    # xs N-slice
                pl.BlockSpec((1, tile), lambda n, k: (0, n)),     # inv_deg row
            ],
            out_specs=pl.BlockSpec((B, tile), lambda n, k: (0, n)),
            scratch_shapes=[pltpu.VMEM((Mp, tile), jnp.float32)],
        ),
        compiler_params=pltpu.CompilerParams(
            dimension_semantics=("parallel", "arbitrary")),
    )(xs, lt, xs, inv_deg)

    return out[:, :nv]


def _build_laplacian(faces_np, nv):
    """Deterministic adjacency build (mirrors the torch __init__ buffer)."""
    lap = np.zeros([nv, nv], dtype=np.float32)
    lap[faces_np[:, 0], faces_np[:, 1]] = 1
    lap[faces_np[:, 1], faces_np[:, 0]] = 1
    lap[faces_np[:, 1], faces_np[:, 2]] = 1
    lap[faces_np[:, 2], faces_np[:, 1]] = 1
    lap[faces_np[:, 2], faces_np[:, 0]] = 1
    lap[faces_np[:, 0], faces_np[:, 2]] = 1
    return lap


if __name__ == "__main__":
    key = jax.random.PRNGKey(0)
    k_faces, k_x = jax.random.split(key)

    # Small but non-trivial shapes: nv deliberately NOT a multiple of 128 so
    # the padding path is exercised, and tile=128 gives a (3, 3) grid that
    # exercises init/accumulate/finalize across K tiles.
    B, nv, nf, C = 2, 300, 600, 3

    faces = np.asarray(jax.random.randint(k_faces, (nf, 3), 0, nv),
                       dtype=np.int64)
    laplacian = jnp.asarray(_build_laplacian(faces, nv))
    x = jax.random.normal(k_x, (B, nv, C), dtype=jnp.float32)

    out = preframe_laplacian_loss(laplacian, x, tile=128)
    out = jax.block_until_ready(out)

    # Pure-JAX reference (same math as the torch forward).
    deg = jnp.sum(laplacian, axis=0)[None, :, None] + 1e-6
    x_sub = jnp.einsum("vw,bwc->bvc", laplacian, x) / deg
    ref = jnp.mean((x_sub - x) ** 2, axis=2)
    np.testing.assert_allclose(np.asarray(out), np.asarray(ref),
                               rtol=1e-5, atol=1e-5)

    print("KERNEL_OK")
</pallas_src>

<mosaic_0001>
module attributes {stable_mosaic.version = 11 : i64} {
  func.func @_laplacian_loss_kernel(%arg0: i32, %arg1: i32, %arg2: memref<8x128xf32, #tpu.memory_space<vmem>>, %arg3: memref<128x128xbf16, #tpu.memory_space<vmem>>, %arg4: memref<8x128xf32, #tpu.memory_space<vmem>>, %arg5: memref<1x128xf32, #tpu.memory_space<vmem>>, %arg6: memref<2x128xf32, #tpu.memory_space<vmem>>, %arg7: memref<8x128xf32, #tpu.memory_space<vmem>>) attributes {dimension_semantics = [#tpu.dimension_semantics<parallel>, #tpu.dimension_semantics<arbitrary>], iteration_bounds = array<i64: 3, 3>, scalar_prefetch = 0 : i64, scratch_operands = 1 : i64, tpu.core_type = #tpu.core_type<tc>, window_params = [{transform_indices = @transform_0, window_bounds = array<i64: 8, 128>}, {transform_indices = @transform_1, window_bounds = array<i64: 128, 128>}, {transform_indices = @transform_2, window_bounds = array<i64: 8, 128>}, {transform_indices = @transform_3, window_bounds = array<i64: 1, 128>}, {transform_indices = @transform_4, window_bounds = array<i64: 2, 128>}]} {
    %c0_i32 = arith.constant 0 : i32
    %0 = arith.cmpi eq, %arg1, %c0_i32 : i32
    %1 = arith.extui %0 : i1 to i32
    %c0_i32_0 = arith.constant 0 : i32
    %2 = arith.cmpi ne, %1, %c0_i32_0 : i32
    scf.if %2 {
      %cst_9 = arith.constant 0.000000e+00 : f32
      %13 = vector.broadcast %cst_9 : f32 to vector<8x128xf32>
      %c0_10 = arith.constant 0 : index
      %c0_11 = arith.constant 0 : index
      %14 = vector.load %arg7[%c0_10, %c0_11] : memref<8x128xf32, #tpu.memory_space<vmem>>, vector<8x128xf32>
      tpu.vector_store %arg7[%c0_10, %c0_11], %13 {strides = array<i32>} : memref<8x128xf32, #tpu.memory_space<vmem>>, vector<8x128xf32>,
    } else {
    }
    %c0 = arith.constant 0 : index
    %c0_1 = arith.constant 0 : index
    %3 = vector.load %arg3[%c0, %c0_1] : memref<128x128xbf16, #tpu.memory_space<vmem>>, vector<128x128xbf16>
    %4 = arith.extf %3 : vector<128x128xbf16> to vector<128x128xf32>
    %c0_2 = arith.constant 0 : index
    %c0_3 = arith.constant 0 : index
    %5 = vector.load %arg7[%c0_2, %c0_3] : memref<8x128xf32, #tpu.memory_space<vmem>>, vector<8x128xf32>
    %c0_4 = arith.constant 0 : index
    %c0_5 = arith.constant 0 : index
    %6 = vector.load %arg2[%c0_4, %c0_5] : memref<8x128xf32, #tpu.memory_space<vmem>>, vector<8x128xf32>
    %cst = arith.constant dense<0.000000e+00> : vector<8x128xf32>
    %7 = tpu.matmul %6, %4, %cst {dimension_numbers = #tpu.dot_dimension_numbers<[1], [0], [0], [1], [0, 0, 1, 1], [], []>} : vector<8x128xf32>, vector<128x128xf32>, vector<8x128xf32> -> vector<8x128xf32>
    %8 = arith.addf %5, %7 : vector<8x128xf32>
    %c0_6 = arith.constant 0 : index
    %c0_7 = arith.constant 0 : index
    %9 = vector.load %arg7[%c0_6, %c0_7] : memref<8x128xf32, #tpu.memory_space<vmem>>, vector<8x128xf32>
    tpu.vector_store %arg7[%c0_6, %c0_7], %8 {strides = array<i32>} : memref<8x128xf32, #tpu.memory_space<vmem>>, vector<8x128xf32>,
    %c2_i32 = arith.constant 2 : i32
    %10 = arith.cmpi eq, %arg1, %c2_i32 : i32
    %11 = arith.extui %10 : i1 to i32
    %c0_i32_8 = arith.constant 0 : i32
    %12 = arith.cmpi ne, %11, %c0_i32_8 : i32
    scf.if %12 {
      %c0_9 = arith.constant 0 : index
      %c0_10 = arith.constant 0 : index
      %13 = vector.load %arg7[%c0_9, %c0_10] : memref<8x128xf32, #tpu.memory_space<vmem>>, vector<8x128xf32>
      %c0_11 = arith.constant 0 : index
      %c0_12 = arith.constant 0 : index
      %14 = vector.load %arg5[%c0_11, %c0_12] : memref<1x128xf32, #tpu.memory_space<vmem>>, vector<1x128xf32>
      %15 = vector.broadcast %14 : vector<1x128xf32> to vector<8x128xf32>
      %16 = arith.mulf %13, %15 : vector<8x128xf32>
      %c0_13 = arith.constant 0 : index
      %c0_14 = arith.constant 0 : index
      %17 = vector.load %arg4[%c0_13, %c0_14] : memref<8x128xf32, #tpu.memory_space<vmem>>, vector<8x128xf32>
      %18 = arith.subf %16, %17 : vector<8x128xf32>
      %19 = arith.mulf %18, %18 : vector<8x128xf32>
      %20 = vector.extract_strided_slice %19 {offsets = [0, 0], sizes = [2, 128], strides = [1, 1]} : vector<8x128xf32> to vector<2x128xf32>
      %21 = vector.extract_strided_slice %19 {offsets = [2, 0], sizes = [2, 128], strides = [1, 1]} : vector<8x128xf32> to vector<2x128xf32>
      %22 = arith.addf %20, %21 : vector<2x128xf32>
      %23 = vector.extract_strided_slice %19 {offsets = [4, 0], sizes = [2, 128], strides = [1, 1]} : vector<8x128xf32> to vector<2x128xf32>
      %24 = arith.addf %22, %23 : vector<2x128xf32>
      %cst_15 = arith.constant 0.333333343 : f32
      %25 = vector.broadcast %cst_15 : f32 to vector<2x128xf32>
      %26 = arith.mulf %24, %25 : vector<2x128xf32>
      %c0_16 = arith.constant 0 : index
      %c0_17 = arith.constant 0 : index
      %27 = vector.load %arg6[%c0_16, %c0_17] : memref<2x128xf32, #tpu.memory_space<vmem>>, vector<2x128xf32>
      tpu.vector_store %arg6[%c0_16, %c0_17], %26 {strides = array<i32>} : memref<2x128xf32, #tpu.memory_space<vmem>>, vector<2x128xf32>,
    } else {
    }
    return
  }
  func.func @transform_0(%arg0: i32, %arg1: i32) -> (i32, i32) {
    %c0_i32 = arith.constant 0 : i32
    %c0_i32_0 = arith.constant 0 : i32
    return %c0_i32, %arg1 : i32, i32
  }
  func.func @transform_1(%arg0: i32, %arg1: i32) -> (i32, i32) {
    %c0_i32 = arith.constant 0 : i32
    return %arg1, %arg0 : i32, i32
  }
  func.func @transform_2(%arg0: i32, %arg1: i32) -> (i32, i32) {
    %c0_i32 = arith.constant 0 : i32
    %c0_i32_0 = arith.constant 0 : i32
    return %c0_i32, %arg0 : i32, i32
  }
  func.func @transform_3(%arg0: i32, %arg1: i32) -> (i32, i32) {
    %c0_i32 = arith.constant 0 : i32
    %c0_i32_0 = arith.constant 0 : i32
    return %c0_i32, %arg0 : i32, i32
  }
  func.func @transform_4(%arg0: i32, %arg1: i32) -> (i32, i32) {
    %c0_i32 = arith.constant 0 : i32
    %c0_i32_0 = arith.constant 0 : i32
    return %c0_i32, %arg0 : i32, i32
  }
}

</mosaic_0001>

<llo_original>
// kernel: tpu_custom_call.1
$region0: #{tpu_custom_call.1}
  #allocation0 [shape = 'u32[]', space=smem, size = 0x4, offset = 0x4, fixed_abs, tag = 'smem constant byte address 0x4 - core index']
  #allocation1 [shape = 'u32[72,128]{1,0:T(1,128)}', space=vmem, size = 0x9000, scoped, tag = 'internal scratch']
  #allocation2 [shape = 'f32[8,128]{1,0:T(8,128)}', space=vmem, size = 0x1000, scoped, tag = 'scratch operand']
  %s0 = inlined_call_operand.hbm [shape: f32[8,384], index: 0, kind: input, shape index: {}]
  %s1 = inlined_call_operand.hbm [shape: bf16[384,384], index: 1, kind: input, shape index: {}]
  %s2 = inlined_call_operand.hbm [shape: f32[8,384], index: 2, kind: input, shape index: {}]
  %s3 = inlined_call_operand.hbm [shape: f32[1,384], index: 3, kind: input, shape index: {}]
  %s4 = inlined_call_operand.hbm [shape: f32[2,384], index: 4, kind: output, shape index: {}]
  %s5 = sld [smem:[#allocation0]]
  $region73: #{tpu_custom_call.1} parent=0
    _
  %s7 = ssub.s32 1, %s5
  %s8 = scalar_select 0, %s7, %s5
  $region1: #{tpu_custom_call.1} parent=0
    #allocation3 [shape = 'u8[8192]{0}', space=vmem, size = 0x2000, scoped, tag = 'input window, operand 0']
    #allocation4 [shape = 's32[2]{0}', space=sflag, size = 0x8, scoped, tag = 'scoped memory for tpu_custom_call.1']
    #allocation5 [shape = 's32[2]{0}', space=sflag, size = 0x8, scoped, tag = 'scoped memory for tpu_custom_call.1']
    #allocation6 [shape = 'u8[65536]{0}', space=vmem, size = 0x10000, scoped, tag = 'input window, operand 1']
    #allocation7 [shape = 's32[2]{0}', space=sflag, size = 0x8, scoped, tag = 'scoped memory for tpu_custom_call.1']
    #allocation8 [shape = 'u8[8192]{0}', space=vmem, size = 0x2000, scoped, tag = 'input window, operand 2']
    #allocation9 [shape = 'u8[1024]{0}', space=vmem, size = 0x400, scoped, tag = 'input window, operand 3']
    #allocation10 [shape = 's32[2]{0}', space=sflag, size = 0x8, scoped, tag = 'scoped memory for tpu_custom_call.1']
    #allocation11 [shape = 'u8[2048]{0}', space=vmem, size = 0x800, scoped, tag = 'output window, operand 0']
    %9 = vsyncpa [#allocation4], 0
    %s10 = scalar_lea.sflag [#allocation4], 1
    %11 = vsyncpa %s10, 0
    %12 = vsyncpa [#allocation7], 0
    %s13 = scalar_lea.sflag [#allocation7], 1
    %14 = vsyncpa %s13, 0
    %15 = vsyncpa [#allocation10], 0
    %s16 = scalar_lea.sflag [#allocation10], 1
    %17 = vsyncpa %s16, 0
    %18 = vsyncpa [#allocation5], 0
    %s19 = scalar_lea.sflag [#allocation5], 1
    %20 = vsyncpa %s19, 0
    loop: start=0, step=1, limit=11
    $region2: #{tpu_custom_call.1} parent=1 // loop_pre_header
      _
    $region3: #{tpu_custom_call.1} parent=1 // loop_header
      %s22 = sphi 0, %s26
      %p23 = scmp.ge.s32.totalorder %s22, 11
      %s29 = sphi 0, %s41
      %s30 = sphi 0, %s37
      %s31 = sphi 0, %s29
      %s32 = sphi 0, %s30
      %s33 = sphi 0, %s31
      %s34 = sphi 0, %s32
      %s44 = sphi 0, %s46
      %s47 = sphi 0, %s44
      %s48 = sphi 0, %s47
      %s64 = sphi 0, %s48
      %s72 = sphi 0, %s74
      %s75 = sphi 0, %s72
      %s76 = sphi 0, %s75
      %s92 = sphi 0, %s76
      %s98 = sphi 0, %s100
      %s101 = sphi 0, %s98
      %s102 = sphi 0, %s101
      %s118 = sphi 0, %s102
      %s124 = sphi 0, %s126
      %s127 = sphi 0, %s124
      %s128 = sphi 0, %s127
      %s144 = sphi 0, %s128
      %s150 = sphi 0, %s152
      %s153 = sphi 0, %s150
      %s154 = sphi 0, %s153
      %s170 = sphi 0, %s154
    $region4: #{tpu_custom_call.1} parent=1 // loop_header_branch
      %25 = sbr.rel (%p23) target = $region8
    $region5: #{tpu_custom_call.1} parent=1 // loop_body
      %s27 = ssub.s32 %s22, 1
      %s28 = ssub.s32 %s22, 2
      %s35 = sadd.s32 1, %s30
      %p36 = scmp.ge.s32.totalorder %s35, 3
      %s37 = scalar_select %p36, 0, %s35
      %s38 = sadd.s32 1, %s29
      %s39 = scalar_select %p36, %s38, %s29
      %p40 = scmp.ge.s32.totalorder %s39, 3
      %s41 = scalar_select %p40, 0, %s39
      %s42 = ssub.s32 %s30, %s37
      %p43 = scmp.eq.s32.totalorder %s42, 0
      %s45 = sadd.s32 %s44, 1
      %s46 = scalar_select %p43, %s44, %s45
      %p49 = pneg %p43
      %p50 = scmp.eq.s32.totalorder %s22, 8
      %p51 = por %p49, %p50
      %p52 = scmp.ne.s32.totalorder %s44, %s47
      %p53 = scmp.eq.s32.totalorder %s22, 0
      %p54 = por %p52, %p53
      %p55 = scmp.ne.s32.totalorder %s44, %s47
      %p56 = scmp.eq.s32.totalorder %s27, 8
      %p57 = por %p55, %p56
      %p58 = scmp.ne.s32.totalorder %s47, %s48
      %p59 = scmp.eq.s32.totalorder %s27, 0
      %p60 = por %p58, %p59
      %p61 = scmp.ne.s32.totalorder %s47, %s48
      %p62 = scmp.eq.s32.totalorder %s28, 8
      %p63 = por %p61, %p62
      %p65 = scmp.ne.s32.totalorder %s48, %s64
      %p66 = scmp.eq.s32.totalorder %s28, 0
      %p67 = por %p65, %p66
      %s68 = ssub.s32 %s30, %s37
      %s69 = ssub.s32 %s29, %s41
      %s70 = sor.u32 %s68, %s69
      %p71 = scmp.eq.s32.totalorder %s70, 0
      %s73 = sadd.s32 %s72, 1
      %s74 = scalar_select %p71, %s72, %s73
      %p77 = pneg %p71
      %p78 = scmp.eq.s32.totalorder %s22, 8
      %p79 = por %p77, %p78
      %p80 = scmp.ne.s32.totalorder %s72, %s75
      %p81 = scmp.eq.s32.totalorder %s22, 0
      %p82 = por %p80, %p81
      %p83 = scmp.ne.s32.totalorder %s72, %s75
      %p84 = scmp.eq.s32.totalorder %s27, 8
      %p85 = por %p83, %p84
      %p86 = scmp.ne.s32.totalorder %s75, %s76
      %p87 = scmp.eq.s32.totalorder %s27, 0
      %p88 = por %p86, %p87
      %p89 = scmp.ne.s32.totalorder %s75, %s76
      %p90 = scmp.eq.s32.totalorder %s28, 8
      %p91 = por %p89, %p90
      %p93 = scmp.ne.s32.totalorder %s76, %s92
      %p94 = scmp.eq.s32.totalorder %s28, 0
      %p95 = por %p93, %p94
      %s96 = ssub.s32 %s29, %s41
      %p97 = scmp.eq.s32.totalorder %s96, 0
      %s99 = sadd.s32 %s98, 1
      %s100 = scalar_select %p97, %s98, %s99
      %p103 = pneg %p97
      %p104 = scmp.eq.s32.totalorder %s22, 8
      %p105 = por %p103, %p104
      %p106 = scmp.ne.s32.totalorder %s98, %s101
      %p107 = scmp.eq.s32.totalorder %s22, 0
      %p108 = por %p106, %p107
      %p109 = scmp.ne.s32.totalorder %s98, %s101
      %p110 = scmp.eq.s32.totalorder %s27, 8
      %p111 = por %p109, %p110
      %p112 = scmp.ne.s32.totalorder %s101, %s102
      %p113 = scmp.eq.s32.totalorder %s27, 0
      %p114 = por %p112, %p113
      %p115 = scmp.ne.s32.totalorder %s101, %s102
      %p116 = scmp.eq.s32.totalorder %s28, 8
      %p117 = por %p115, %p116
      %p119 = scmp.ne.s32.totalorder %s102, %s118
      %p120 = scmp.eq.s32.totalorder %s28, 0
      %p121 = por %p119, %p120
      %s122 = ssub.s32 %s29, %s41
      %p123 = scmp.eq.s32.totalorder %s122, 0
      %s125 = sadd.s32 %s124, 1
      %s126 = scalar_select %p123, %s124, %s125
      %p129 = pneg %p123
      %p130 = scmp.eq.s32.totalorder %s22, 8
      %p131 = por %p129, %p130
      %p132 = scmp.ne.s32.totalorder %s124, %s127
      %p133 = scmp.eq.s32.totalorder %s22, 0
      %p134 = por %p132, %p133
      %p135 = scmp.ne.s32.totalorder %s124, %s127
      %p136 = scmp.eq.s32.totalorder %s27, 8
      %p137 = por %p135, %p136
      %p138 = scmp.ne.s32.totalorder %s127, %s128
      %p139 = scmp.eq.s32.totalorder %s27, 0
      %p140 = por %p138, %p139
      %p141 = scmp.ne.s32.totalorder %s127, %s128
      %p142 = scmp.eq.s32.totalorder %s28, 8
      %p143 = por %p141, %p142
      %p145 = scmp.ne.s32.totalorder %s128, %s144
      %p146 = scmp.eq.s32.totalorder %s28, 0
      %p147 = por %p145, %p146
      %s148 = ssub.s32 %s29, %s41
      %p149 = scmp.eq.s32.totalorder %s148, 0
      %s151 = sadd.s32 %s150, 1
      %s152 = scalar_select %p149, %s150, %s151
      %p155 = pneg %p149
      %p156 = scmp.eq.s32.totalorder %s22, 8
      %p157 = por %p155, %p156
      %p158 = scmp.ne.s32.totalorder %s150, %s153
      %p159 = scmp.eq.s32.totalorder %s22, 0
      %p160 = por %p158, %p159
      %p161 = scmp.ne.s32.totalorder %s150, %s153
      %p162 = scmp.eq.s32.totalorder %s27, 8
      %p163 = por %p161, %p162
      %p164 = scmp.ne.s32.totalorder %s153, %s154
      %p165 = scmp.eq.s32.totalorder %s27, 0
      %p166 = por %p164, %p165
      %p167 = scmp.ne.s32.totalorder %s153, %s154
      %p168 = scmp.eq.s32.totalorder %s28, 8
      %p169 = por %p167, %p168
      %p171 = scmp.ne.s32.totalorder %s154, %s170
      %p172 = scmp.eq.s32.totalorder %s28, 0
      %p173 = por %p171, %p172
      %p174 = scmp.le.s32.totalorder 1, %s22
      %p175 = scmp.lt.s32.totalorder %s22, 10
      %p176 = pnand %p174, %p175
      %p177 = pneg %p176
      // Predicated region
      $region9: #{tpu_custom_call.1} parent=5 // pred_check
        _
      $region10: #{tpu_custom_call.1} parent=5 // pred_check_branch
        %179 = sbr.rel (%p176) target = $region12
      $region11: #{tpu_custom_call.1} parent=5 // pred_region
        %s180 = ssub.s32 %s22, 1
      $region12: #{tpu_custom_call.1} parent=5 // pred_fallthru
        _
      %p181 = scmp.lt.s32.totalorder %s22, 9
      // Predicated region
      $region13: #{tpu_custom_call.1} parent=5 // pred_check
        %p182 = pneg %p181
      $region14: #{tpu_custom_call.1} parent=5 // pred_check_branch
        %184 = sbr.rel (%p182) target = $region16
      $region15: #{tpu_custom_call.1} parent=5 // pred_region
        // Predicated region
        $region17: #{tpu_custom_call.1} parent=15 // pred_check
          %p185 = pneg %p54
        $region18: #{tpu_custom_call.1} parent=15 // pred_check_branch
          %187 = sbr.rel (%p185) target = $region20
        $region19: #{tpu_custom_call.1} parent=15 // pred_region
          %s188 = sand.u32 %s44, 1
          %s189 = scalar_lea.sflag [#allocation4], %s188
          %s190 = sand.u32 %s44, 1
          %s191 = smul.addr %s190, 8
          %s192 = scalar_lea.vmem [#allocation3], %s191
          %194 = vsyncadd %s189, 0
          %s195 = smul.addr %s30, 8
          %s196 = scalar_lea.hbm %s0, %s195
          %s198 = sshll.u32 %s196, 4
          %s199 = int_to_ptr.hbm [resolvable:$true] %s198
          %s200 = sshll.u32 %s192, 4
          %s201 = int_to_ptr.vmem [resolvable:$true] %s200
          %203 = dma.hbm_to_vmem [thread:$0]  %s199, 128, %s201, %s189
        $region20: #{tpu_custom_call.1} parent=15 // pred_fallthru
          _
        // Predicated region
        $region21: #{tpu_custom_call.1} parent=15 // pred_check
          %p204 = pneg %p82
        $region22: #{tpu_custom_call.1} parent=15 // pred_check_branch
          %206 = sbr.rel (%p204) target = $region24
        $region23: #{tpu_custom_call.1} parent=15 // pred_region
          %s207 = sand.u32 %s22, 1
          %s208 = scalar_lea.sflag [#allocation7], %s207
          %s209 = sand.u32 %s72, 1
          %s210 = smul.addr %s209, 64
          %s211 = scalar_lea.vmem [#allocation6], %s210
          %s212 = smul.u32 16, %s30
          %214 = vsyncadd %s208, 0
          %s215 = smul.addr %s212, 3
          %s216 = sadd.s32 %s29, %s215
          %s217 = smul.addr %s216, 4
          %s218 = scalar_lea.hbm %s1, %s217
          %s219 = sshll.u32 %s218, 4
          %s220 = int_to_ptr.hbm [resolvable:$true] %s219
          %s221 = sshll.u32 %s211, 4
          %s222 = int_to_ptr.vmem [resolvable:$true] %s221
          %227 = dma.hbm_to_vmem [thread:$0]  %s220, 1024, %s222, %s208, 192, 64, 4
        $region24: #{tpu_custom_call.1} parent=15 // pred_fallthru
          _
        // Predicated region
        $region25: #{tpu_custom_call.1} parent=15 // pred_check
          %p228 = pneg %p108
        $region26: #{tpu_custom_call.1} parent=15 // pred_check_branch
          %230 = sbr.rel (%p228) target = $region28
        $region27: #{tpu_custom_call.1} parent=15 // pred_region
          %s231 = sand.u32 %s22, 1
          %s232 = scalar_lea.sflag [#allocation7], %s231
          %s233 = sand.u32 %s98, 1
          %s234 = smul.addr %s233, 8
          %s235 = scalar_lea.vmem [#allocation8], %s234
          %237 = vsyncadd %s232, 0
          %s238 = smul.addr %s29, 8
          %s239 = scalar_lea.hbm %s2, %s238
          %s241 = sshll.u32 %s239, 4
          %s242 = int_to_ptr.hbm [resolvable:$true] %s241
          %s243 = sshll.u32 %s235, 4
          %s244 = int_to_ptr.vmem [resolvable:$true] %s243
          %246 = dma.hbm_to_vmem [thread:$0]  %s242, 128, %s244, %s232
        $region28: #{tpu_custom_call.1} parent=15 // pred_fallthru
          _
        // Predicated region
        $region29: #{tpu_custom_call.1} parent=15 // pred_check
          %p247 = pneg %p134
        $region30: #{tpu_custom_call.1} parent=15 // pred_check_branch
          %249 = sbr.rel (%p247) target = $region32
        $region31: #{tpu_custom_call.1} parent=15 // pred_region
          %s250 = sand.u32 %s124, 1
          %s251 = scalar_lea.sflag [#allocation10], %s250
          %s252 = sand.u32 %s124, 1
          %s253 = scalar_lea.vmem [#allocation9], %s252
          %255 = vsyncadd %s251, 0
          %s256 = scalar_lea.hbm %s3, %s29
          %s258 = sshll.u32 %s256, 4
          %s259 = int_to_ptr.hbm [resolvable:$true] %s258
          %s260 = sshll.u32 %s253, 4
          %s261 = int_to_ptr.vmem [resolvable:$true] %s260
          %263 = dma.hbm_to_vmem [thread:$0]  %s259, 16, %s261, %s251
        $region32: #{tpu_custom_call.1} parent=15 // pred_fallthru
          _
      $region16: #{tpu_custom_call.1} parent=5 // pred_fallthru
        _
      %p264 = scmp.le.s32.totalorder 1, %s22
      %p265 = scmp.lt.s32.totalorder %s22, 10
      %p266 = pnand %p264, %p265
      %p267 = pneg %p266
      // Predicated region
      $region33: #{tpu_custom_call.1} parent=5 // pred_check
        _
      $region34: #{tpu_custom_call.1} parent=5 // pred_check_branch
        %269 = sbr.rel (%p266) target = $region36
      $region35: #{tpu_custom_call.1} parent=5 // pred_region
        %s270 = ssub.s32 %s22, 1
        %s271 = sand.u32 %s47, 1
        %s272 = scalar_lea.sflag [#allocation4], %s271
        %s273 = sand.u32 %s47, 1
        %s274 = smul.addr %s273, 8
        %s275 = scalar_lea.vmem [#allocation3], %s274
        // Predicated region
        $region37: #{tpu_custom_call.1} parent=35 // pred_check
          %p276 = pneg %p60
        $region38: #{tpu_custom_call.1} parent=35 // pred_check_branch
          %278 = sbr.rel (%p276) target = $region40
        $region39: #{tpu_custom_call.1} parent=35 // pred_region
          %280 = dma.done %s272, 128
        $region40: #{tpu_custom_call.1} parent=35 // pred_fallthru
          _
        %s281 = sand.u32 %s27, 1
        %s282 = scalar_lea.sflag [#allocation7], %s281
        %s283 = sand.u32 %s75, 1
        %s284 = smul.addr %s283, 64
        %s285 = scalar_lea.vmem [#allocation6], %s284
        // Predicated region
        $region41: #{tpu_custom_call.1} parent=35 // pred_check
          %p286 = pneg %p88
        $region42: #{tpu_custom_call.1} parent=35 // pred_check_branch
          %288 = sbr.rel (%p286) target = $region44
        $region43: #{tpu_custom_call.1} parent=35 // pred_region
          %290 = dma.done %s282, 1024
        $region44: #{tpu_custom_call.1} parent=35 // pred_fallthru
          _
        %s291 = sand.u32 %s27, 1
        %s292 = scalar_lea.sflag [#allocation7], %s291
        %s293 = sand.u32 %s101, 1
        %s294 = smul.addr %s293, 8
        %s295 = scalar_lea.vmem [#allocation8], %s294
        // Predicated region
        $region45: #{tpu_custom_call.1} parent=35 // pred_check
          %p296 = pneg %p114
        $region46: #{tpu_custom_call.1} parent=35 // pred_check_branch
          %298 = sbr.rel (%p296) target = $region48
        $region47: #{tpu_custom_call.1} parent=35 // pred_region
          %300 = dma.done %s292, 128
        $region48: #{tpu_custom_call.1} parent=35 // pred_fallthru
          _
        %s301 = sand.u32 %s127, 1
        %s302 = scalar_lea.sflag [#allocation10], %s301
        %s303 = sand.u32 %s127, 1
        %s304 = scalar_lea.vmem [#allocation9], %s303
        // Predicated region
        $region49: #{tpu_custom_call.1} parent=35 // pred_check
          %p305 = pneg %p140
        $region50: #{tpu_custom_call.1} parent=35 // pred_check_branch
          %307 = sbr.rel (%p305) target = $region52
        $region51: #{tpu_custom_call.1} parent=35 // pred_region
          %309 = dma.done %s302, 16
        $region52: #{tpu_custom_call.1} parent=35 // pred_fallthru
          _
        %s310 = sand.u32 %s47, 1
        %s311 = scalar_lea.sflag [#allocation4], %s310
        %s312 = sand.u32 %s47, 1
        %s313 = smul.addr %s312, 8
        %s314 = scalar_lea.vmem [#allocation3], %s313
        %p315 = pneg %p60
        %p316 = pneg %p57
        %s317 = sand.u32 %s27, 1
        %s318 = scalar_lea.sflag [#allocation7], %s317
        %s319 = sand.u32 %s75, 1
        %s320 = smul.addr %s319, 64
        %s321 = scalar_lea.vmem [#allocation6], %s320
        %p322 = pneg %p88
        %p323 = pneg %p85
        %s324 = sand.u32 %s27, 1
        %s325 = scalar_lea.sflag [#allocation7], %s324
        %s326 = sand.u32 %s101, 1
        %s327 = smul.addr %s326, 8
        %s328 = scalar_lea.vmem [#allocation8], %s327
        %p329 = pneg %p114
        %p330 = pneg %p111
        %s331 = sand.u32 %s127, 1
        %s332 = scalar_lea.sflag [#allocation10], %s331
        %s333 = sand.u32 %s127, 1
        %s334 = scalar_lea.vmem [#allocation9], %s333
        %p335 = pneg %p140
        %p336 = pneg %p137
        %p337 = pneg %p166
        %p338 = pneg %p163
        %s339 = sand.u32 %s153, 1
        %s340 = scalar_lea.sflag [#allocation5], %s339
        %s341 = sand.u32 %s153, 1
        %s342 = smul.addr %s341, 2
        %s343 = scalar_lea.vmem [#allocation11], %s342
        %s344 = smul.u32 16, %s32
        %p345 = scmp.eq.s32.totalorder %s32, 0
        // Predicated region
        $region53: #{tpu_custom_call.1} parent=35 // pred_check
          %p346 = pneg %p345
        $region54: #{tpu_custom_call.1} parent=35 // pred_check_branch
          %348 = sbr.rel (%p346) target = $region56
        $region55: #{tpu_custom_call.1} parent=35 // pred_region
          %349 = vst [vmem:[#allocation2] sm:$0xff] 0.0
        $region56: #{tpu_custom_call.1} parent=35 // pred_fallthru
          _
        %v350 = vld [vmem:[%s285] sm:$0xf]
        %v351 = vld [vmem:[%s285 + $0x4] sm:$0xf]
        %v352 = vld [vmem:[%s285 + $0x8] sm:$0xf]
        %v353 = vld [vmem:[%s285 + $0xc] sm:$0xf]
        %v354 = vld [vmem:[%s285 + $0x10] sm:$0xf]
        %v355 = vld [vmem:[%s285 + $0x14] sm:$0xf]
        %v356 = vld [vmem:[%s285 + $0x18] sm:$0xf]
        %v357 = vld [vmem:[%s285 + $0x1c] sm:$0xf]
        %v358 = vld [vmem:[%s285 + $0x20] sm:$0xf]
        %v359 = vld [vmem:[%s285 + $0x24] sm:$0xf]
        %v360 = vld [vmem:[%s285 + $0x28] sm:$0xf]
        %v361 = vld [vmem:[%s285 + $0x2c] sm:$0xf]
        %v362 = vld [vmem:[%s285 + $0x30] sm:$0xf]
        %v363 = vld [vmem:[%s285 + $0x34] sm:$0xf]
        %v364 = vld [vmem:[%s285 + $0x38] sm:$0xf]
        %v365 = vld [vmem:[%s285 + $0x3c] sm:$0xf]
        %v366 = vunpack.c.l.bf16 %v350
        %v367 = vunpack.c.l.bf16 %v351
        %v368 = vunpack.c.l.bf16 %v352
        %v369 = vunpack.c.l.bf16 %v353
        %v370 = vunpack.c.l.bf16 %v354
        %v371 = vunpack.c.l.bf16 %v355
        %v372 = vunpack.c.l.bf16 %v356
        %v373 = vunpack.c.l.bf16 %v357
        %v374 = vunpack.c.l.bf16 %v358
        %v375 = vunpack.c.l.bf16 %v359
        %v376 = vunpack.c.l.bf16 %v360
        %v377 = vunpack.c.l.bf16 %v361
        %v378 = vunpack.c.l.bf16 %v362
        %v379 = vunpack.c.l.bf16 %v363
        %v380 = vunpack.c.l.bf16 %v364
        %v381 = vunpack.c.l.bf16 %v365
        %v382 = vld [vmem:[#allocation2] sm:$0xff]
        %v383 = vld [vmem:[%s275] sm:$0xff]
        %384 = vmatpush.msra.mxu0 %v381
        %385 = vmatpush.msra.mxu0 %v380
        %386 = vmatpush.msra.mxu0 %v379
        %387 = vmatpush.msra.mxu0 %v378
        %388 = vmatpush.msra.mxu0 %v377
        %389 = vmatpush.msra.mxu0 %v376
        %390 = vmatpush.msra.mxu0 %v375
        %391 = vmatpush.msra.mxu0 %v374
        %392 = vmatpush.msra.mxu0 %v373
        %393 = vmatpush.msra.mxu0 %v372
        %394 = vmatpush.msra.mxu0 %v371
        %395 = vmatpush.msra.mxu0 %v370
        %396 = vmatpush.msra.mxu0 %v369
        %397 = vmatpush.msra.mxu0 %v368
        %398 = vmatpush.msra.mxu0 %v367
        %399 = vmatpush.msra.mxu0 %v366
        %400 = vmatmul.f32.gmra.mxu0 %v383
        %v401 = vpop.f32.mrf.mxu0
        %v402 = vadd.f32 0.0, %v401
        %403 = vdwg.mxu0
        %v404 = vadd.f32 %v382, %v402
        %405 = vst [vmem:[#allocation2] sm:$0xff] %v404
        %p406 = scmp.eq.s32.totalorder %s32, 2
        // Predicated region
        $region57: #{tpu_custom_call.1} parent=35 // pred_check
          %p407 = pneg %p406
        $region58: #{tpu_custom_call.1} parent=35 // pred_check_branch
          %409 = sbr.rel (%p407) target = $region60
        $region59: #{tpu_custom_call.1} parent=35 // pred_region
          %v410 = vld [vmem:[#allocation2] sm:$0xff]
          %v411 = vld [vmem:[%s304] sm:$0x1]
          %v413 = vperm.slane %v411, 0
          %v415 = vmul.f32 %v410, %v413
          %v416 = vld [vmem:[%s295] sm:$0xff]
          %v417 = vsub.f32 %v415, %v416
          %v418 = vmul.f32 %v417, %v417
          %v420 = vrot.slane %v418, 2
          %v422 = vadd.f32 %v418, %v420
          %v423 = vrot.slane %v418, 4
          %v425 = vadd.f32 %v422, %v423
          %v426 = vmul.f32 %v425, 0.33333334
          %427 = vst [vmem:[%s343] sm:$0x3] %v426
        $region60: #{tpu_custom_call.1} parent=35 // pred_fallthru
          _
        %s428 = sand.u32 %s153, 1
        %s429 = scalar_lea.sflag [#allocation5], %s428
        %s430 = sand.u32 %s153, 1
        %s431 = smul.addr %s430, 2
        %s432 = scalar_lea.vmem [#allocation11], %s431
        // Predicated region
        $region61: #{tpu_custom_call.1} parent=35 // pred_check
          %p433 = pneg %p163
        $region62: #{tpu_custom_call.1} parent=35 // pred_check_branch
          %435 = sbr.rel (%p433) target = $region64
        $region63: #{tpu_custom_call.1} parent=35 // pred_region
          %437 = vsyncadd %s429, 0
          %s438 = smul.addr %s31, 2
          %s439 = scalar_lea.hbm %s4, %s438
          %s441 = sshll.u32 %s432, 4
          %s442 = int_to_ptr.vmem [resolvable:$true] %s441
          %s443 = sshll.u32 %s439, 4
          %s444 = int_to_ptr.hbm [resolvable:$true] %s443
          %446 = dma.vmem_to_hbm [thread:$0]  %s442, 32, %s444, %s429
        $region64: #{tpu_custom_call.1} parent=35 // pred_fallthru
          _
      $region36: #{tpu_custom_call.1} parent=5 // pred_fallthru
        _
      %p447 = scmp.le.s32.totalorder 2, %s22
      // Predicated region
      $region65: #{tpu_custom_call.1} parent=5 // pred_check
        %p448 = pneg %p447
      $region66: #{tpu_custom_call.1} parent=5 // pred_check_branch
        %450 = sbr.rel (%p448) target = $region68
      $region67: #{tpu_custom_call.1} parent=5 // pred_region
        %s451 = ssub.s32 %s22, 2
        // Predicated region
        $region69: #{tpu_custom_call.1} parent=67 // pred_check
          %p452 = pneg %p169
        $region70: #{tpu_custom_call.1} parent=67 // pred_check_branch
          %454 = sbr.rel (%p452) target = $region72
        $region71: #{tpu_custom_call.1} parent=67 // pred_region
          %s455 = sand.u32 %s154, 1
          %s456 = scalar_lea.sflag [#allocation5], %s455
          %s457 = sand.u32 %s154, 1
          %s458 = smul.addr %s457, 2
          %s459 = scalar_lea.vmem [#allocation11], %s458
          %461 = dma.done %s456, 32
        $region72: #{tpu_custom_call.1} parent=67 // pred_fallthru
          _
      $region68: #{tpu_custom_call.1} parent=5 // pred_fallthru
        _
    $region6: #{tpu_custom_call.1} parent=1 // loop_footer
      %s26 = sadd.s32 1, %s22
    $region7: #{tpu_custom_call.1} parent=1 // loop_footer_branch
      %21 = sbr.rel target = $region3
    $region8: #{tpu_custom_call.1} parent=1 // loop_exit
      _
    %462 = vsyncpa [#allocation4], 1
    %s463 = scalar_lea.sflag [#allocation4], 1
    %464 = vsyncpa %s463, 1
    %465 = vsyncpa [#allocation7], 1
    %s466 = scalar_lea.sflag [#allocation7], 1
    %467 = vsyncpa %s466, 1
    %468 = vsyncpa [#allocation10], 1
    %s469 = scalar_lea.sflag [#allocation10], 1
    %470 = vsyncpa %s469, 1
    %471 = vsyncpa [#allocation5], 1
    %s472 = scalar_lea.sflag [#allocation5], 1
    %473 = vsyncpa %s472, 1

</llo_original>
